<compile_context>
chip_gen: v7x
topology: tpu7x:2x2x1
jax: 0.10.0
libtpu: 0.0.40
codegen_flags: <defaults>
</compile_context>

<pallas_src>
import functools
import math

import jax
import jax.numpy as jnp
from jax.experimental import pallas as pl
from jax.experimental.pallas import tpu as pltpu

# ----------------------------- model hyperparams -----------------------------
B = 2          # batch (number of sequences)
N = 8          # tokens per sequence
HIDDEN_D = 32  # d
N_HEADS = 2    # n_heads
D_HEAD = HIDDEN_D // N_HEADS


# --------------------------------- kernel ------------------------------------
def msa_kernel(x_ref, w_ref, b_ref, o_ref, *, d_head):
    x = x_ref[...].astype(jnp.float32)                       # (B*H, N, dh)

    # Batched fused QKV projection; 1/sqrt(dh) already folded into the Q block.
    qkv = jax.lax.dot_general(
        x, w_ref[...],
        dimension_numbers=(((2,), (1,)), ((0,), (0,))),
        preferred_element_type=jnp.float32) + b_ref[...]     # (B*H, N, 3*dh)

    q = qkv[..., 0 * d_head:1 * d_head]                      # (B*H, N, dh)
    k = qkv[..., 1 * d_head:2 * d_head]
    v = qkv[..., 2 * d_head:3 * d_head]

    # scores = q @ k^T, expressed as contract-on-last-dim (no transposed copy).
    s = jax.lax.dot_general(
        q, k,
        dimension_numbers=(((2,), (2,)), ((0,), (0,))),
        preferred_element_type=jnp.float32)                  # (B*H, N, N)

    # Numerically-stable softmax over the last axis (exact divide: tolerance).
    s = s - jnp.max(s, axis=-1, keepdims=True)
    e = jnp.exp(s)
    a = e / jnp.sum(e, axis=-1, keepdims=True)

    out = jax.lax.dot_general(
        a, v,
        dimension_numbers=(((2,), (1,)), ((0,), (0,))),
        preferred_element_type=jnp.float32)                  # (B*H, N, dh)

    o_ref[...] = out.astype(o_ref.dtype)                     # single full store


# ------------------------- one-time parameter packing -------------------------
def pack_msa_params(wq, bq, wk, bk, wv, bv, n_seqs):
    """Fuse per-head (in,out) Q/K/V Linears into batched QKV weights.

    Returns W (B*H, dh, 3*dh) and b (B*H, 1, 3*dh), column layout [Q | K | V]
    per head, batch index bh = seq*H + head (matching the head-major x layout).
    The 1/sqrt(d_head) attention scale is folded into the Q block. Called ONCE
    at parameter-construction time.
    """
    _, d_head, _ = wq.shape
    scale = 1.0 / math.sqrt(d_head)
    w_h = jnp.concatenate([wq * scale, wk, wv], axis=-1)             # (H, dh, 3dh)
    b_h = jnp.concatenate([bq * scale, bk, bv], axis=-1)[:, None, :]  # (H, 1, 3dh)
    w = jnp.tile(w_h, (n_seqs, 1, 1))                                 # (B*H, dh, 3dh)
    b = jnp.tile(b_h, (n_seqs, 1, 1))                                 # (B*H, 1, 3dh)
    return w.astype(jnp.float32), b.astype(jnp.float32)


# ---------------------------------- wrapper ------------------------------------
def msa(x, w_qkv, b_qkv, n_heads):
    bb, nn, dd = x.shape
    dh = dd // n_heads

    # Head-major relayout outside the kernel (layout plumbing, not compute).
    x_heads = (x.reshape(bb, nn, n_heads, dh)
                 .transpose(0, 2, 1, 3)
                 .reshape(bb * n_heads, nn, dh))              # (B*H, N, dh)

    kernel = functools.partial(msa_kernel, d_head=dh)
    vmem = pltpu.MemorySpace.VMEM

    out_heads = pl.pallas_call(
        kernel,
        out_shape=jax.ShapeDtypeStruct((bb * n_heads, nn, dh), x.dtype),
        in_specs=[
            pl.BlockSpec(memory_space=vmem),   # x_heads
            pl.BlockSpec(memory_space=vmem),   # W_qkv
            pl.BlockSpec(memory_space=vmem),   # b_qkv
        ],
        out_specs=pl.BlockSpec(memory_space=vmem),
    )(x_heads, w_qkv, b_qkv)

    # Undo head-major relayout; heads concatenate along features in head order,
    # matching torch.hstack(seq_result).
    return (out_heads.reshape(bb, n_heads, nn, dh)
                     .transpose(0, 2, 1, 3)
                     .reshape(bb, nn, dd))


# ----------------------------- pure-JAX reference -------------------------------
def msa_ref(x, wq, bq, wk, bk, wv, bv):
    n_heads, d_head, _ = wq.shape
    heads = []
    for h in range(n_heads):
        seq = x[:, :, h * d_head:(h + 1) * d_head]            # (B, N, dh)
        q = seq @ wq[h] + bq[h]
        k = seq @ wk[h] + bk[h]
        v = seq @ wv[h] + bv[h]
        s = jnp.einsum("bnd,bmd->bnm", q, k) / math.sqrt(d_head)
        a = jax.nn.softmax(s, axis=-1)
        heads.append(jnp.einsum("bnm,bmd->bnd", a, v))
    return jnp.concatenate(heads, axis=-1)


# ------------------------------------ main ---------------------------------------
if __name__ == "__main__":
    key = jax.random.PRNGKey(0)
    keys = jax.random.split(key, 8)

    x = jax.random.normal(keys[0], (B, N, HIDDEN_D), dtype=jnp.float32)

    s = 0.05
    wq = s * jax.random.normal(keys[1], (N_HEADS, D_HEAD, D_HEAD), jnp.float32)
    bq = s * jax.random.normal(keys[2], (N_HEADS, D_HEAD), jnp.float32)
    wk = s * jax.random.normal(keys[3], (N_HEADS, D_HEAD, D_HEAD), jnp.float32)
    bk = s * jax.random.normal(keys[4], (N_HEADS, D_HEAD), jnp.float32)
    wv = s * jax.random.normal(keys[5], (N_HEADS, D_HEAD, D_HEAD), jnp.float32)
    bv = s * jax.random.normal(keys[6], (N_HEADS, D_HEAD), jnp.float32)

    # One-time static parameter transform (fused QKV + folded attention scale).
    w_qkv, b_qkv = pack_msa_params(wq, bq, wk, bk, wv, bv, n_seqs=B)
    w_qkv = jax.block_until_ready(w_qkv)
    b_qkv = jax.block_until_ready(b_qkv)

    msa_fn = jax.jit(functools.partial(msa, n_heads=N_HEADS))
    out = jax.block_until_ready(msa_fn(x, w_qkv, b_qkv))
    ref = jax.block_until_ready(msa_ref(x, wq, bq, wk, bk, wv, bv))

    assert out.shape == (B, N, HIDDEN_D), out.shape
    assert jnp.allclose(out, ref, rtol=1e-4, atol=1e-4), \
        f"max abs err {jnp.max(jnp.abs(out - ref))}"

    print("KERNEL_OK")
</pallas_src>

<mosaic_0001>
module attributes {stable_mosaic.version = 11 : i64} {
  func.func @msa_kernel(%arg0: memref<4x8x16xf32, #tpu.memory_space<vmem>>, %arg1: memref<4x16x48xf32, #tpu.memory_space<vmem>>, %arg2: memref<4x1x48xf32, #tpu.memory_space<vmem>>, %arg3: memref<4x8x16xf32, #tpu.memory_space<vmem>>) attributes {dimension_semantics = [], scalar_prefetch = 0 : i64, scratch_operands = 0 : i64, tpu.core_type = #tpu.core_type<tc>} {
    %c0 = arith.constant 0 : index
    %c0_0 = arith.constant 0 : index
    %c0_1 = arith.constant 0 : index
    %0 = vector.load %arg0[%c0, %c0_0, %c0_1] : memref<4x8x16xf32, #tpu.memory_space<vmem>>, vector<4x8x16xf32>
    %c0_2 = arith.constant 0 : index
    %c0_3 = arith.constant 0 : index
    %c0_4 = arith.constant 0 : index
    %1 = vector.load %arg1[%c0_2, %c0_3, %c0_4] : memref<4x16x48xf32, #tpu.memory_space<vmem>>, vector<4x16x48xf32>
    %cst = arith.constant dense<0.000000e+00> : vector<4x8x48xf32>
    %2 = tpu.matmul %0, %1, %cst {dimension_numbers = #tpu.dot_dimension_numbers<[2], [1], [1], [2], [0, 0, 0, 1, 1, 2], [0], [0]>} : vector<4x8x16xf32>, vector<4x16x48xf32>, vector<4x8x48xf32> -> vector<4x8x48xf32>
    %c0_5 = arith.constant 0 : index
    %c0_6 = arith.constant 0 : index
    %c0_7 = arith.constant 0 : index
    %3 = vector.load %arg2[%c0_5, %c0_6, %c0_7] : memref<4x1x48xf32, #tpu.memory_space<vmem>>, vector<4x1x48xf32>
    %4 = vector.broadcast %3 : vector<4x1x48xf32> to vector<4x8x48xf32>
    %5 = arith.addf %2, %4 : vector<4x8x48xf32>
    %6 = vector.extract_strided_slice %5 {offsets = [0, 0, 0], sizes = [4, 8, 16], strides = [1, 1, 1]} : vector<4x8x48xf32> to vector<4x8x16xf32>
    %7 = vector.extract_strided_slice %5 {offsets = [0, 0, 16], sizes = [4, 8, 16], strides = [1, 1, 1]} : vector<4x8x48xf32> to vector<4x8x16xf32>
    %8 = vector.extract_strided_slice %5 {offsets = [0, 0, 32], sizes = [4, 8, 16], strides = [1, 1, 1]} : vector<4x8x48xf32> to vector<4x8x16xf32>
    %cst_8 = arith.constant dense<0.000000e+00> : vector<4x8x8xf32>
    %9 = tpu.matmul %6, %7, %cst_8 {dimension_numbers = #tpu.dot_dimension_numbers<[2], [2], [1], [1], [0, 0, 0, 1, 1, 1], [0], [0]>} : vector<4x8x16xf32>, vector<4x8x16xf32>, vector<4x8x8xf32> -> vector<4x8x8xf32>
    %cst_9 = arith.constant dense<0xFF800000> : vector<4x8xf32>
    %10 = vector.multi_reduction <maximumf>, %9, %cst_9 [2] : vector<4x8x8xf32> to vector<4x8xf32>
    %11 = vector.shape_cast %10 : vector<4x8xf32> to vector<4x8x1xf32>
    %12 = vector.broadcast %11 : vector<4x8x1xf32> to vector<4x8x8xf32>
    %13 = arith.subf %9, %12 : vector<4x8x8xf32>
    %14 = math.exp %13 : vector<4x8x8xf32>
    %cst_10 = arith.constant dense<0.000000e+00> : vector<4x8xf32>
    %15 = vector.multi_reduction <add>, %14, %cst_10 [2] : vector<4x8x8xf32> to vector<4x8xf32>
    %16 = vector.shape_cast %15 : vector<4x8xf32> to vector<4x8x1xf32>
    %17 = vector.broadcast %16 : vector<4x8x1xf32> to vector<4x8x8xf32>
    %18 = arith.divf %14, %17 : vector<4x8x8xf32>
    %cst_11 = arith.constant dense<0.000000e+00> : vector<4x8x16xf32>
    %19 = tpu.matmul %18, %8, %cst_11 {dimension_numbers = #tpu.dot_dimension_numbers<[2], [1], [1], [2], [0, 0, 0, 1, 1, 2], [0], [0]>} : vector<4x8x8xf32>, vector<4x8x16xf32>, vector<4x8x16xf32> -> vector<4x8x16xf32>
    %c0_12 = arith.constant 0 : index
    %c0_13 = arith.constant 0 : index
    %c0_14 = arith.constant 0 : index
    %20 = vector.load %arg3[%c0_12, %c0_13, %c0_14] : memref<4x8x16xf32, #tpu.memory_space<vmem>>, vector<4x8x16xf32>
    tpu.vector_store %arg3[%c0_12, %c0_13, %c0_14], %19 {strides = array<i32>} : memref<4x8x16xf32, #tpu.memory_space<vmem>>, vector<4x8x16xf32>,
    return
  }
}

</mosaic_0001>

<llo_original>
// kernel: msa.1
$region0: #{msa.1}
  #allocation0 [shape = 'u32[]', space=smem, size = 0x4, offset = 0x4, fixed_abs, tag = 'smem constant byte address 0x4 - core index']
  #allocation1 [shape = 'u32[144,128]{1,0:T(1,128)}', space=vmem, size = 0x12000, scoped, tag = 'internal scratch']
  %s0 = inlined_call_operand.vmem [shape: f32[4,8,16], index: 0, kind: input, shape index: {}]
  %s1 = inlined_call_operand.vmem [shape: f32[4,16,48], index: 1, kind: input, shape index: {}]
  %s2 = inlined_call_operand.vmem [shape: f32[4,1,48], index: 2, kind: input, shape index: {}]
  %s3 = inlined_call_operand.vmem [shape: f32[4,8,16], index: 3, kind: output, shape index: {}]
  %s4 = sld [smem:[#allocation0]]
  $region22: #{msa.1} parent=0
    _
  %s6 = ssub.s32 1, %s4
  %s7 = scalar_select 0, %s6, %s4
  // Predicated region
  $region2: #{msa.1} parent=0 // pred_check
    _
  $region3: #{msa.1} parent=0 // pred_check_branch
    %9 = sbr.rel (0) target = $region5
  $region4: #{msa.1} parent=0 // pred_region
    _
  $region5: #{msa.1} parent=0 // pred_fallthru
    _
  // Predicated region
  $region6: #{msa.1} parent=0 // pred_check
    _
  $region7: #{msa.1} parent=0 // pred_check_branch
    %11 = sbr.rel (0) target = $region9
  $region8: #{msa.1} parent=0 // pred_region
    _
  $region9: #{msa.1} parent=0 // pred_fallthru
    _
  // Predicated region
  $region10: #{msa.1} parent=0 // pred_check
    _
  $region11: #{msa.1} parent=0 // pred_check_branch
    %13 = sbr.rel (0) target = $region13
  $region12: #{msa.1} parent=0 // pred_region
    _
  $region13: #{msa.1} parent=0 // pred_fallthru
    _
  %v14 = vld [vmem:[%s0] sm:$0xff]
  %v15 = vld [vmem:[%s0 + $0x8] sm:$0xff]
  %v16 = vld [vmem:[%s0 + $0x10] sm:$0xff]
  %v17 = vld [vmem:[%s0 + $0x18] sm:$0xff]
  %v18 = vld [vmem:[%s1] sm:$0xff]
  %v19 = vld [vmem:[%s1 + $0x8] sm:$0xff]
  %v20 = vld [vmem:[%s1 + $0x10] sm:$0xff]
  %v21 = vld [vmem:[%s1 + $0x18] sm:$0xff]
  %v22 = vld [vmem:[%s1 + $0x20] sm:$0xff]
  %v23 = vld [vmem:[%s1 + $0x28] sm:$0xff]
  %v24 = vld [vmem:[%s1 + $0x30] sm:$0xff]
  %v25 = vld [vmem:[%s1 + $0x38] sm:$0xff]
  %v26 = vld [vmem:[%s2] sm:$0x1]
  %v27 = vld [vmem:[%s2 + $0x1] sm:$0x1]
  %v28 = vld [vmem:[%s2 + $0x2] sm:$0x1]
  %v29 = vld [vmem:[%s2 + $0x3] sm:$0x1]
  %v34 = vlaneseq
  %v35 = vshrl.u32 %v34, 7
  %v36 = vsub.s32 0, %v35
  %v37 = vrot.slane %v26, %v36
  %v38 = vlaneseq
  %v39 = vshrl.u32 %v38, 7
  %v40 = vsub.s32 0, %v39
  %v41 = vrot.slane %v27, %v40
  %v42 = vlaneseq
  %v43 = vshrl.u32 %v42, 7
  %v44 = vsub.s32 0, %v43
  %v45 = vrot.slane %v28, %v44
  %v46 = vlaneseq
  %v47 = vshrl.u32 %v46, 7
  %v48 = vsub.s32 0, %v47
  %v49 = vrot.slane %v29, %v48
  %vm54 = vcmask 130048
  %v56 = vsel %vm54, %v14, 0
  %58 = vmatprep.subr.mxu0 0.0
  %59 = vmatpush1.msra.mxu0 %v18
  %60 = vmatprep.subr.mxu0 0.0
  %61 = vmatpush1.msra.mxu0 %v19
  %62 = vmatprep.subr.mxu0 0.0
  %63 = vmatpush1.msra.mxu0 0.0
  %64 = vmatprep.subr.mxu0 0.0
  %65 = vmatpush1.msra.mxu0 0.0
  %66 = vmatprep.subr.mxu0 0.0
  %67 = vmatpush1.msra.mxu0 0.0
  %68 = vmatprep.subr.mxu0 0.0
  %69 = vmatpush1.msra.mxu0 0.0
  %70 = vmatprep.subr.mxu0 0.0
  %71 = vmatpush1.msra.mxu0 0.0
  %72 = vmatprep.subr.mxu0 0.0
  %73 = vmatpush1.msra.mxu0 0.0
  %74 = vmatprep.subr.mxu0 0.0
  %75 = vmatpush1.msra.mxu0 0.0
  %76 = vmatprep.subr.mxu0 0.0
  %77 = vmatpush1.msra.mxu0 0.0
  %78 = vmatprep.subr.mxu0 0.0
  %79 = vmatpush1.msra.mxu0 0.0
  %80 = vmatprep.subr.mxu0 0.0
  %81 = vmatpush1.msra.mxu0 0.0
  %82 = vmatprep.subr.mxu0 0.0
  %83 = vmatpush1.msra.mxu0 0.0
  %84 = vmatprep.subr.mxu0 0.0
  %85 = vmatpush1.msra.mxu0 0.0
  %86 = vmatprep.subr.mxu0 0.0
  %87 = vmatpush1.msra.mxu0 0.0
  %88 = vmatprep.subr.mxu0 0.0
  %89 = vmatpush1.msra.mxu0 0.0
  %90 = vmatprep.subr.mxu0 0.0
  %91 = vmatpush1.msra.mxu0 0.0
  %92 = vmatprep.subr.mxu0 0.0
  %93 = vmatpush1.msra.mxu0 0.0
  %94 = vmatprep.subr.mxu0 0.0
  %95 = vmatpush1.msra.mxu0 0.0
  %96 = vmatprep.subr.mxu0 0.0
  %97 = vmatpush1.msra.mxu0 0.0
  %98 = vmatprep.subr.mxu0 0.0
  %99 = vmatpush1.msra.mxu0 0.0
  %100 = vmatprep.subr.mxu0 0.0
  %101 = vmatpush1.msra.mxu0 0.0
  %102 = vmatprep.subr.mxu0 0.0
  %103 = vmatpush1.msra.mxu0 0.0
  %104 = vmatprep.subr.mxu0 0.0
  %105 = vmatpush1.msra.mxu0 0.0
  %106 = vmatprep.subr.mxu0 0.0
  %107 = vmatpush1.msra.mxu0 0.0
  %108 = vmatprep.subr.mxu0 0.0
  %109 = vmatpush1.msra.mxu0 0.0
  %110 = vmatprep.subr.mxu0 0.0
  %111 = vmatpush1.msra.mxu0 0.0
  %112 = vmatprep.subr.mxu0 0.0
  %113 = vmatpush1.msra.mxu0 0.0
  %114 = vmatprep.subr.mxu0 0.0
  %115 = vmatpush1.msra.mxu0 0.0
  %116 = vmatprep.subr.mxu0 0.0
  %117 = vmatpush1.msra.mxu0 0.0
  %118 = vmatprep.subr.mxu0 0.0
  %119 = vmatpush1.msra.mxu0 0.0
  %120 = vmatprep.subr.mxu0 0.0
  %121 = vmatpush1.msra.mxu0 0.0
  %122 = vmatprep.mubr.f32.mxu0 0.0
  %123 = vmatmul.mubr.f32.gmra.mrb[0].mxu0 %v56
  %v124 = vpop.f32.mrb[0].mxu0
  %v125 = vadd.f32 %v37, %v124
  %v126 = vpop.f32.mrb[0].mxu0
  %127 = vdwg.mxu0
  %v129 = vsel %vm54, %v15, 0
  %131 = vmatprep.subr.mxu0 0.0
  %132 = vmatpush1.msra.mxu0 %v20
  %133 = vmatprep.subr.mxu0 0.0
  %134 = vmatpush1.msra.mxu0 %v21
  %135 = vmatprep.subr.mxu0 0.0
  %136 = vmatpush1.msra.mxu0 0.0
  %137 = vmatprep.subr.mxu0 0.0
  %138 = vmatpush1.msra.mxu0 0.0
  %139 = vmatprep.subr.mxu0 0.0
  %140 = vmatpush1.msra.mxu0 0.0
  %141 = vmatprep.subr.mxu0 0.0
  %142 = vmatpush1.msra.mxu0 0.0
  %143 = vmatprep.subr.mxu0 0.0
  %144 = vmatpush1.msra.mxu0 0.0
  %145 = vmatprep.subr.mxu0 0.0
  %146 = vmatpush1.msra.mxu0 0.0
  %147 = vmatprep.subr.mxu0 0.0
  %148 = vmatpush1.msra.mxu0 0.0
  %149 = vmatprep.subr.mxu0 0.0
  %150 = vmatpush1.msra.mxu0 0.0
  %151 = vmatprep.subr.mxu0 0.0
  %152 = vmatpush1.msra.mxu0 0.0
  %153 = vmatprep.subr.mxu0 0.0
  %154 = vmatpush1.msra.mxu0 0.0
  %155 = vmatprep.subr.mxu0 0.0
  %156 = vmatpush1.msra.mxu0 0.0
  %157 = vmatprep.subr.mxu0 0.0
  %158 = vmatpush1.msra.mxu0 0.0
  %159 = vmatprep.subr.mxu0 0.0
  %160 = vmatpush1.msra.mxu0 0.0
  %161 = vmatprep.subr.mxu0 0.0
  %162 = vmatpush1.msra.mxu0 0.0
  %163 = vmatprep.subr.mxu0 0.0
  %164 = vmatpush1.msra.mxu0 0.0
  %165 = vmatprep.subr.mxu0 0.0
  %166 = vmatpush1.msra.mxu0 0.0
  %167 = vmatprep.subr.mxu0 0.0
  %168 = vmatpush1.msra.mxu0 0.0
  %169 = vmatprep.subr.mxu0 0.0
  %170 = vmatpush1.msra.mxu0 0.0
  %171 = vmatprep.subr.mxu0 0.0
  %172 = vmatpush1.msra.mxu0 0.0
  %173 = vmatprep.subr.mxu0 0.0
  %174 = vmatpush1.msra.mxu0 0.0
  %175 = vmatprep.subr.mxu0 0.0
  %176 = vmatpush1.msra.mxu0 0.0
  %177 = vmatprep.subr.mxu0 0.0
  %178 = vmatpush1.msra.mxu0 0.0
  %179 = vmatprep.subr.mxu0 0.0
  %180 = vmatpush1.msra.mxu0 0.0
  %181 = vmatprep.subr.mxu0 0.0
  %182 = vmatpush1.msra.mxu0 0.0
  %183 = vmatprep.subr.mxu0 0.0
  %184 = vmatpush1.msra.mxu0 0.0
  %185 = vmatprep.subr.mxu0 0.0
  %186 = vmatpush1.msra.mxu0 0.0
  %187 = vmatprep.subr.mxu0 0.0
  %188 = vmatpush1.msra.mxu0 0.0
  %189 = vmatprep.subr.mxu0 0.0
  %190 = vmatpush1.msra.mxu0 0.0
  %191 = vmatprep.subr.mxu0 0.0
  %192 = vmatpush1.msra.mxu0 0.0
  %193 = vmatprep.subr.mxu0 0.0
  %194 = vmatpush1.msra.mxu0 0.0
  %195 = vmatprep.mubr.f32.mxu0 0.0
  %196 = vmatmul.mubr.f32.gmra.mrb[0].mxu0 %v129
  %v197 = vpop.f32.mrb[0].mxu0
  %v198 = vadd.f32 %v41, %v197
  %v199 = vpop.f32.mrb[0].mxu0
  %200 = vdwg.mxu0
  %v202 = vsel %vm54, %v16, 0
  %204 = vmatprep.subr.mxu0 0.0
  %205 = vmatpush1.msra.mxu0 %v22
  %206 = vmatprep.subr.mxu0 0.0
  %207 = vmatpush1.msra.mxu0 %v23
  %208 = vmatprep.subr.mxu0 0.0
  %209 = vmatpush1.msra.mxu0 0.0
  %210 = vmatprep.subr.mxu0 0.0
  %211 = vmatpush1.msra.mxu0 0.0
  %212 = vmatprep.subr.mxu0 0.0
  %213 = vmatpush1.msra.mxu0 0.0
  %214 = vmatprep.subr.mxu0 0.0
  %215 = vmatpush1.msra.mxu0 0.0
  %216 = vmatprep.subr.mxu0 0.0
  %217 = vmatpush1.msra.mxu0 0.0
  %218 = vmatprep.subr.mxu0 0.0
  %219 = vmatpush1.msra.mxu0 0.0
  %220 = vmatprep.subr.mxu0 0.0
  %221 = vmatpush1.msra.mxu0 0.0
  %222 = vmatprep.subr.mxu0 0.0
  %223 = vmatpush1.msra.mxu0 0.0
  %224 = vmatprep.subr.mxu0 0.0
  %225 = vmatpush1.msra.mxu0 0.0
  %226 = vmatprep.subr.mxu0 0.0
  %227 = vmatpush1.msra.mxu0 0.0
  %228 = vmatprep.subr.mxu0 0.0
  %229 = vmatpush1.msra.mxu0 0.0
  %230 = vmatprep.subr.mxu0 0.0
  %231 = vmatpush1.msra.mxu0 0.0
  %232 = vmatprep.subr.mxu0 0.0
  %233 = vmatpush1.msra.mxu0 0.0
  %234 = vmatprep.subr.mxu0 0.0
  %235 = vmatpush1.msra.mxu0 0.0
  %236 = vmatprep.subr.mxu0 0.0
  %237 = vmatpush1.msra.mxu0 0.0
  %238 = vmatprep.subr.mxu0 0.0
  %239 = vmatpush1.msra.mxu0 0.0
  %240 = vmatprep.subr.mxu0 0.0
  %241 = vmatpush1.msra.mxu0 0.0
  %242 = vmatprep.subr.mxu0 0.0
  %243 = vmatpush1.msra.mxu0 0.0
  %244 = vmatprep.subr.mxu0 0.0
  %245 = vmatpush1.msra.mxu0 0.0
  %246 = vmatprep.subr.mxu0 0.0
  %247 = vmatpush1.msra.mxu0 0.0
  %248 = vmatprep.subr.mxu0 0.0
  %249 = vmatpush1.msra.mxu0 0.0
  %250 = vmatprep.subr.mxu0 0.0
  %251 = vmatpush1.msra.mxu0 0.0
  %252 = vmatprep.subr.mxu0 0.0
  %253 = vmatpush1.msra.mxu0 0.0
  %254 = vmatprep.subr.mxu0 0.0
  %255 = vmatpush1.msra.mxu0 0.0
  %256 = vmatprep.subr.mxu0 0.0
  %257 = vmatpush1.msra.mxu0 0.0
  %258 = vmatprep.subr.mxu0 0.0
  %259 = vmatpush1.msra.mxu0 0.0
  %260 = vmatprep.subr.mxu0 0.0
  %261 = vmatpush1.msra.mxu0 0.0
  %262 = vmatprep.subr.mxu0 0.0
  %263 = vmatpush1.msra.mxu0 0.0
  %264 = vmatprep.subr.mxu0 0.0
  %265 = vmatpush1.msra.mxu0 0.0
  %266 = vmatprep.subr.mxu0 0.0
  %267 = vmatpush1.msra.mxu0 0.0
  %268 = vmatprep.mubr.f32.mxu0 0.0
  %269 = vmatmul.mubr.f32.gmra.mrb[0].mxu0 %v202
  %v270 = vpop.f32.mrb[0].mxu0
  %v271 = vadd.f32 %v45, %v270
  %v272 = vpop.f32.mrb[0].mxu0
  %273 = vdwg.mxu0
  %v275 = vsel %vm54, %v17, 0
  %277 = vmatprep.subr.mxu0 0.0
  %278 = vmatpush1.msra.mxu0 %v24
  %279 = vmatprep.subr.mxu0 0.0
  %280 = vmatpush1.msra.mxu0 %v25
  %281 = vmatprep.subr.mxu0 0.0
  %282 = vmatpush1.msra.mxu0 0.0
  %283 = vmatprep.subr.mxu0 0.0
  %284 = vmatpush1.msra.mxu0 0.0
  %285 = vmatprep.subr.mxu0 0.0
  %286 = vmatpush1.msra.mxu0 0.0
  %287 = vmatprep.subr.mxu0 0.0
  %288 = vmatpush1.msra.mxu0 0.0
  %289 = vmatprep.subr.mxu0 0.0
  %290 = vmatpush1.msra.mxu0 0.0
  %291 = vmatprep.subr.mxu0 0.0
  %292 = vmatpush1.msra.mxu0 0.0
  %293 = vmatprep.subr.mxu0 0.0
  %294 = vmatpush1.msra.mxu0 0.0
  %295 = vmatprep.subr.mxu0 0.0
  %296 = vmatpush1.msra.mxu0 0.0
  %297 = vmatprep.subr.mxu0 0.0
  %298 = vmatpush1.msra.mxu0 0.0
  %299 = vmatprep.subr.mxu0 0.0
  %300 = vmatpush1.msra.mxu0 0.0
  %301 = vmatprep.subr.mxu0 0.0
  %302 = vmatpush1.msra.mxu0 0.0
  %303 = vmatprep.subr.mxu0 0.0
  %304 = vmatpush1.msra.mxu0 0.0
  %305 = vmatprep.subr.mxu0 0.0
  %306 = vmatpush1.msra.mxu0 0.0
  %307 = vmatprep.subr.mxu0 0.0
  %308 = vmatpush1.msra.mxu0 0.0
  %309 = vmatprep.subr.mxu0 0.0
  %310 = vmatpush1.msra.mxu0 0.0
  %311 = vmatprep.subr.mxu0 0.0
  %312 = vmatpush1.msra.mxu0 0.0
  %313 = vmatprep.subr.mxu0 0.0
  %314 = vmatpush1.msra.mxu0 0.0
  %315 = vmatprep.subr.mxu0 0.0
  %316 = vmatpush1.msra.mxu0 0.0
  %317 = vmatprep.subr.mxu0 0.0
  %318 = vmatpush1.msra.mxu0 0.0
  %319 = vmatprep.subr.mxu0 0.0
  %320 = vmatpush1.msra.mxu0 0.0
  %321 = vmatprep.subr.mxu0 0.0
  %322 = vmatpush1.msra.mxu0 0.0
  %323 = vmatprep.subr.mxu0 0.0
  %324 = vmatpush1.msra.mxu0 0.0
  %325 = vmatprep.subr.mxu0 0.0
  %326 = vmatpush1.msra.mxu0 0.0
  %327 = vmatprep.subr.mxu0 0.0
  %328 = vmatpush1.msra.mxu0 0.0
  %329 = vmatprep.subr.mxu0 0.0
  %330 = vmatpush1.msra.mxu0 0.0
  %331 = vmatprep.subr.mxu0 0.0
  %332 = vmatpush1.msra.mxu0 0.0
  %333 = vmatprep.subr.mxu0 0.0
  %334 = vmatpush1.msra.mxu0 0.0
  %335 = vmatprep.subr.mxu0 0.0
  %336 = vmatpush1.msra.mxu0 0.0
  %337 = vmatprep.subr.mxu0 0.0
  %338 = vmatpush1.msra.mxu0 0.0
  %339 = vmatprep.subr.mxu0 0.0
  %340 = vmatpush1.msra.mxu0 0.0
  %341 = vmatprep.mubr.f32.mxu0 0.0
  %342 = vmatmul.mubr.f32.gmra.mrb[0].mxu0 %v275
  %v343 = vpop.f32.mrb[0].mxu0
  %v344 = vadd.f32 %v49, %v343
  %v345 = vpop.f32.mrb[0].mxu0
  %346 = vdwg.mxu0
  %348 = vrot.lane.b32.xlu0 %v125, 112
  %v349 = vpop.permute.xlu0 %348
  %v350 = vsel %vm54, %v125, 0
  %v352 = vsel %vm54, %v349, 0
  %354 = vmatprep.subr.mxu0 0.0
  %355 = vmatpush1.xpose.msra.mxu0 %v352
  %356 = vmatprep.subr.mxu0 0.0
  %357 = vmatpush1.xpose.msra.mxu0 0.0
  %358 = vmatprep.subr.mxu0 0.0
  %359 = vmatpush1.xpose.msra.mxu0 0.0
  %360 = vmatprep.subr.mxu0 0.0
  %361 = vmatpush1.xpose.msra.mxu0 0.0
  %362 = vmatprep.subr.mxu0 0.0
  %363 = vmatpush1.xpose.msra.mxu0 0.0
  %364 = vmatprep.subr.mxu0 0.0
  %365 = vmatpush1.xpose.msra.mxu0 0.0
  %366 = vmatprep.subr.mxu0 0.0
  %367 = vmatpush1.xpose.msra.mxu0 0.0
  %368 = vmatprep.subr.mxu0 0.0
  %369 = vmatpush1.xpose.msra.mxu0 0.0
  %370 = vmatprep.subr.mxu0 0.0
  %371 = vmatpush1.xpose.msra.mxu0 0.0
  %372 = vmatprep.subr.mxu0 0.0
  %373 = vmatpush1.xpose.msra.mxu0 0.0
  %374 = vmatprep.subr.mxu0 0.0
  %375 = vmatpush1.xpose.msra.mxu0 0.0
  %376 = vmatprep.subr.mxu0 0.0
  %377 = vmatpush1.xpose.msra.mxu0 0.0
  %378 = vmatprep.subr.mxu0 0.0
  %379 = vmatpush1.xpose.msra.mxu0 0.0
  %380 = vmatprep.subr.mxu0 0.0
  %381 = vmatpush1.xpose.msra.mxu0 0.0
  %382 = vmatprep.subr.mxu0 0.0
  %383 = vmatpush1.xpose.msra.mxu0 0.0
  %384 = vmatprep.subr.mxu0 0.0
  %385 = vmatpush1.xpose.msra.mxu0 0.0
  %386 = vmatprep.subr.mxu0 0.0
  %387 = vmatpush1.xpose.msra.mxu0 0.0
  %388 = vmatprep.subr.mxu0 0.0
  %389 = vmatpush1.xpose.msra.mxu0 0.0
  %390 = vmatprep.subr.mxu0 0.0
  %391 = vmatpush1.xpose.msra.mxu0 0.0
  %392 = vmatprep.subr.mxu0 0.0
  %393 = vmatpush1.xpose.msra.mxu0 0.0
  %394 = vmatprep.subr.mxu0 0.0
  %395 = vmatpush1.xpose.msra.mxu0 0.0
  %396 = vmatprep.subr.mxu0 0.0
  %397 = vmatpush1.xpose.msra.mxu0 0.0
  %398 = vmatprep.subr.mxu0 0.0
  %399 = vmatpush1.xpose.msra.mxu0 0.0
  %400 = vmatprep.subr.mxu0 0.0
  %401 = vmatpush1.xpose.msra.mxu0 0.0
  %402 = vmatprep.subr.mxu0 0.0
  %403 = vmatpush1.xpose.msra.mxu0 0.0
  %404 = vmatprep.subr.mxu0 0.0
  %405 = vmatpush1.xpose.msra.mxu0 0.0
  %406 = vmatprep.subr.mxu0 0.0
  %407 = vmatpush1.xpose.msra.mxu0 0.0
  %408 = vmatprep.subr.mxu0 0.0
  %409 = vmatpush1.xpose.msra.mxu0 0.0
  %410 = vmatprep.subr.mxu0 0.0
  %411 = vmatpush1.xpose.msra.mxu0 0.0
  %412 = vmatprep.subr.mxu0 0.0
  %413 = vmatpush1.xpose.msra.mxu0 0.0
  %414 = vmatprep.subr.mxu0 0.0
  %415 = vmatpush1.xpose.msra.mxu0 0.0
  %416 = vmatprep.subr.mxu0 0.0
  %417 = vmatpush1.xpose.msra.mxu0 0.0
  %418 = vmatprep.mubr.f32.mxu0 0.0
  %419 = vmatmul.mubr.f32.gmra.mrb[0].mxu0 %v350
  %v420 = vpop.f32.mrb[0].mxu0
  %v421 = vadd.f32 0.0, %v420
  %v422 = vpop.f32.mrb[0].mxu0
  %423 = vdwg.mxu0
  %425 = vrot.lane.b32.xlu0 %v198, 112
  %v426 = vpop.permute.xlu0 %425
  %v427 = vsel %vm54, %v198, 0
  %v429 = vsel %vm54, %v426, 0
  %431 = vmatprep.subr.mxu0 0.0
  %432 = vmatpush1.xpose.msra.mxu0 %v429
  %433 = vmatprep.subr.mxu0 0.0
  %434 = vmatpush1.xpose.msra.mxu0 0.0
  %435 = vmatprep.subr.mxu0 0.0
  %436 = vmatpush1.xpose.msra.mxu0 0.0
  %437 = vmatprep.subr.mxu0 0.0
  %438 = vmatpush1.xpose.msra.mxu0 0.0
  %439 = vmatprep.subr.mxu0 0.0
  %440 = vmatpush1.xpose.msra.mxu0 0.0
  %441 = vmatprep.subr.mxu0 0.0
  %442 = vmatpush1.xpose.msra.mxu0 0.0
  %443 = vmatprep.subr.mxu0 0.0
  %444 = vmatpush1.xpose.msra.mxu0 0.0
  %445 = vmatprep.subr.mxu0 0.0
  %446 = vmatpush1.xpose.msra.mxu0 0.0
  %447 = vmatprep.subr.mxu0 0.0
  %448 = vmatpush1.xpose.msra.mxu0 0.0
  %449 = vmatprep.subr.mxu0 0.0
  %450 = vmatpush1.xpose.msra.mxu0 0.0
  %451 = vmatprep.subr.mxu0 0.0
  %452 = vmatpush1.xpose.msra.mxu0 0.0
  %453 = vmatprep.subr.mxu0 0.0
  %454 = vmatpush1.xpose.msra.mxu0 0.0
  %455 = vmatprep.subr.mxu0 0.0
  %456 = vmatpush1.xpose.msra.mxu0 0.0
  %457 = vmatprep.subr.mxu0 0.0
  %458 = vmatpush1.xpose.msra.mxu0 0.0
  %459 = vmatprep.subr.mxu0 0.0
  %460 = vmatpush1.xpose.msra.mxu0 0.0
  %461 = vmatprep.subr.mxu0 0.0
  %462 = vmatpush1.xpose.msra.mxu0 0.0
  %463 = vmatprep.subr.mxu0 0.0
  %464 = vmatpush1.xpose.msra.mxu0 0.0
  %465 = vmatprep.subr.mxu0 0.0
  %466 = vmatpush1.xpose.msra.mxu0 0.0
  %467 = vmatprep.subr.mxu0 0.0
  %468 = vmatpush1.xpose.msra.mxu0 0.0
  %469 = vmatprep.subr.mxu0 0.0
  %470 = vmatpush1.xpose.msra.mxu0 0.0
  %471 = vmatprep.subr.mxu0 0.0
  %472 = vmatpush1.xpose.msra.mxu0 0.0
  %473 = vmatprep.subr.mxu0 0.0
  %474 = vmatpush1.xpose.msra.mxu0 0.0
  %475 = vmatprep.subr.mxu0 0.0
  %476 = vmatpush1.xpose.msra.mxu0 0.0
  %477 = vmatprep.subr.mxu0 0.0
  %478 = vmatpush1.xpose.msra.mxu0 0.0
  %479 = vmatprep.subr.mxu0 0.0
  %480 = vmatpush1.xpose.msra.mxu0 0.0
  %481 = vmatprep.subr.mxu0 0.0
  %482 = vmatpush1.xpose.msra.mxu0 0.0
  %483 = vmatprep.subr.mxu0 0.0
  %484 = vmatpush1.xpose.msra.mxu0 0.0
  %485 = vmatprep.subr.mxu0 0.0
  %486 = vmatpush1.xpose.msra.mxu0 0.0
  %487 = vmatprep.subr.mxu0 0.0
  %488 = vmatpush1.xpose.msra.mxu0 0.0
  %489 = vmatprep.subr.mxu0 0.0
  %490 = vmatpush1.xpose.msra.mxu0 0.0
  %491 = vmatprep.subr.mxu0 0.0
  %492 = vmatpush1.xpose.msra.mxu0 0.0
  %493 = vmatprep.subr.mxu0 0.0
  %494 = vmatpush1.xpose.msra.mxu0 0.0
  %495 = vmatprep.mubr.f32.mxu0 0.0
  %496 = vmatmul.mubr.f32.gmra.mrb[0].mxu0 %v427
  %v497 = vpop.f32.mrb[0].mxu0
  %v498 = vadd.f32 0.0, %v497
  %v499 = vpop.f32.mrb[0].mxu0
  %500 = vdwg.mxu0
  %502 = vrot.lane.b32.xlu0 %v271, 112
  %v503 = vpop.permute.xlu0 %502
  %v504 = vsel %vm54, %v271, 0
  %v506 = vsel %vm54, %v503, 0
  %508 = vmatprep.subr.mxu0 0.0
  %509 = vmatpush1.xpose.msra.mxu0 %v506
  %510 = vmatprep.subr.mxu0 0.0
  %511 = vmatpush1.xpose.msra.mxu0 0.0
  %512 = vmatprep.subr.mxu0 0.0
  %513 = vmatpush1.xpose.msra.mxu0 0.0
  %514 = vmatprep.subr.mxu0 0.0
  %515 = vmatpush1.xpose.msra.mxu0 0.0
  %516 = vmatprep.subr.mxu0 0.0
  %517 = vmatpush1.xpose.msra.mxu0 0.0
  %518 = vmatprep.subr.mxu0 0.0
  %519 = vmatpush1.xpose.msra.mxu0 0.0
  %520 = vmatprep.subr.mxu0 0.0
  %521 = vmatpush1.xpose.msra.mxu0 0.0
  %522 = vmatprep.subr.mxu0 0.0
  %523 = vmatpush1.xpose.msra.mxu0 0.0
  %524 = vmatprep.subr.mxu0 0.0
  %525 = vmatpush1.xpose.msra.mxu0 0.0
  %526 = vmatprep.subr.mxu0 0.0
  %527 = vmatpush1.xpose.msra.mxu0 0.0
  %528 = vmatprep.subr.mxu0 0.0
  %529 = vmatpush1.xpose.msra.mxu0 0.0
  %530 = vmatprep.subr.mxu0 0.0
  %531 = vmatpush1.xpose.msra.mxu0 0.0
  %532 = vmatprep.subr.mxu0 0.0
  %533 = vmatpush1.xpose.msra.mxu0 0.0
  %534 = vmatprep.subr.mxu0 0.0
  %535 = vmatpush1.xpose.msra.mxu0 0.0
  %536 = vmatprep.subr.mxu0 0.0
  %537 = vmatpush1.xpose.msra.mxu0 0.0
  %538 = vmatprep.subr.mxu0 0.0
  %539 = vmatpush1.xpose.msra.mxu0 0.0
  %540 = vmatprep.subr.mxu0 0.0
  %541 = vmatpush1.xpose.msra.mxu0 0.0
  %542 = vmatprep.subr.mxu0 0.0
  %543 = vmatpush1.xpose.msra.mxu0 0.0
  %544 = vmatprep.subr.mxu0 0.0
  %545 = vmatpush1.xpose.msra.mxu0 0.0
  %546 = vmatprep.subr.mxu0 0.0
  %547 = vmatpush1.xpose.msra.mxu0 0.0
  %548 = vmatprep.subr.mxu0 0.0
  %549 = vmatpush1.xpose.msra.mxu0 0.0
  %550 = vmatprep.subr.mxu0 0.0
  %551 = vmatpush1.xpose.msra.mxu0 0.0
  %552 = vmatprep.subr.mxu0 0.0
  %553 = vmatpush1.xpose.msra.mxu0 0.0
  %554 = vmatprep.subr.mxu0 0.0
  %555 = vmatpush1.xpose.msra.mxu0 0.0
  %556 = vmatprep.subr.mxu0 0.0
  %557 = vmatpush1.xpose.msra.mxu0 0.0
  %558 = vmatprep.subr.mxu0 0.0
  %559 = vmatpush1.xpose.msra.mxu0 0.0
  %560 = vmatprep.subr.mxu0 0.0
  %561 = vmatpush1.xpose.msra.mxu0 0.0
  %562 = vmatprep.subr.mxu0 0.0
  %563 = vmatpush1.xpose.msra.mxu0 0.0
  %564 = vmatprep.subr.mxu0 0.0
  %565 = vmatpush1.xpose.msra.mxu0 0.0
  %566 = vmatprep.subr.mxu0 0.0
  %567 = vmatpush1.xpose.msra.mxu0 0.0
  %568 = vmatprep.subr.mxu0 0.0
  %569 = vmatpush1.xpose.msra.mxu0 0.0
  %570 = vmatprep.subr.mxu0 0.0
  %571 = vmatpush1.xpose.msra.mxu0 0.0
  %572 = vmatprep.mubr.f32.mxu0 0.0
  %573 = vmatmul.mubr.f32.gmra.mrb[0].mxu0 %v504
  %v574 = vpop.f32.mrb[0].mxu0
  %v575 = vadd.f32 0.0, %v574
  %v576 = vpop.f32.mrb[0].mxu0
  %577 = vdwg.mxu0
  %579 = vrot.lane.b32.xlu0 %v344, 112
  %v580 = vpop.permute.xlu0 %579
  %v581 = vsel %vm54, %v344, 0
  %v583 = vsel %vm54, %v580, 0
  %585 = vmatprep.subr.mxu0 0.0
  %586 = vmatpush1.xpose.msra.mxu0 %v583
  %587 = vmatprep.subr.mxu0 0.0
  %588 = vmatpush1.xpose.msra.mxu0 0.0
  %589 = vmatprep.subr.mxu0 0.0
  %590 = vmatpush1.xpose.msra.mxu0 0.0
  %591 = vmatprep.subr.mxu0 0.0
  %592 = vmatpush1.xpose.msra.mxu0 0.0
  %593 = vmatprep.subr.mxu0 0.0
  %594 = vmatpush1.xpose.msra.mxu0 0.0
  %595 = vmatprep.subr.mxu0 0.0
  %596 = vmatpush1.xpose.msra.mxu0 0.0
  %597 = vmatprep.subr.mxu0 0.0
  %598 = vmatpush1.xpose.msra.mxu0 0.0
  %599 = vmatprep.subr.mxu0 0.0
  %600 = vmatpush1.xpose.msra.mxu0 0.0
  %601 = vmatprep.subr.mxu0 0.0
  %602 = vmatpush1.xpose.msra.mxu0 0.0
  %603 = vmatprep.subr.mxu0 0.0
  %604 = vmatpush1.xpose.msra.mxu0 0.0
  %605 = vmatprep.subr.mxu0 0.0
  %606 = vmatpush1.xpose.msra.mxu0 0.0
  %607 = vmatprep.subr.mxu0 0.0
  %608 = vmatpush1.xpose.msra.mxu0 0.0
  %609 = vmatprep.subr.mxu0 0.0
  %610 = vmatpush1.xpose.msra.mxu0 0.0
  %611 = vmatprep.subr.mxu0 0.0
  %612 = vmatpush1.xpose.msra.mxu0 0.0
  %613 = vmatprep.subr.mxu0 0.0
  %614 = vmatpush1.xpose.msra.mxu0 0.0
  %615 = vmatprep.subr.mxu0 0.0
  %616 = vmatpush1.xpose.msra.mxu0 0.0
  %617 = vmatprep.subr.mxu0 0.0
  %618 = vmatpush1.xpose.msra.mxu0 0.0
  %619 = vmatprep.subr.mxu0 0.0
  %620 = vmatpush1.xpose.msra.mxu0 0.0
  %621 = vmatprep.subr.mxu0 0.0
  %622 = vmatpush1.xpose.msra.mxu0 0.0
  %623 = vmatprep.subr.mxu0 0.0
  %624 = vmatpush1.xpose.msra.mxu0 0.0
  %625 = vmatprep.subr.mxu0 0.0
  %626 = vmatpush1.xpose.msra.mxu0 0.0
  %627 = vmatprep.subr.mxu0 0.0
  %628 = vmatpush1.xpose.msra.mxu0 0.0
  %629 = vmatprep.subr.mxu0 0.0
  %630 = vmatpush1.xpose.msra.mxu0 0.0
  %631 = vmatprep.subr.mxu0 0.0
  %632 = vmatpush1.xpose.msra.mxu0 0.0
  %633 = vmatprep.subr.mxu0 0.0
  %634 = vmatpush1.xpose.msra.mxu0 0.0
  %635 = vmatprep.subr.mxu0 0.0
  %636 = vmatpush1.xpose.msra.mxu0 0.0
  %637 = vmatprep.subr.mxu0 0.0
  %638 = vmatpush1.xpose.msra.mxu0 0.0
  %639 = vmatprep.subr.mxu0 0.0
  %640 = vmatpush1.xpose.msra.mxu0 0.0
  %641 = vmatprep.subr.mxu0 0.0
  %642 = vmatpush1.xpose.msra.mxu0 0.0
  %643 = vmatprep.subr.mxu0 0.0
  %644 = vmatpush1.xpose.msra.mxu0 0.0
  %645 = vmatprep.subr.mxu0 0.0
  %646 = vmatpush1.xpose.msra.mxu0 0.0
  %647 = vmatprep.subr.mxu0 0.0
  %648 = vmatpush1.xpose.msra.mxu0 0.0
  %649 = vmatprep.mubr.f32.mxu0 0.0
  %650 = vmatmul.mubr.f32.gmra.mrb[0].mxu0 %v581
  %v651 = vpop.f32.mrb[0].mxu0
  %v652 = vadd.f32 0.0, %v651
  %v653 = vpop.f32.mrb[0].mxu0
  %654 = vdwg.mxu0
  %vm655 = vcmask 64512
  %v656 = vsel %vm655, %v421, -inf
  %657 = vmax.xlane.f32.xlu0 %v656
  %v658 = vpop.xlane.xlu0 %657
  %v659 = vsel %vm655, %v498, -inf
  %660 = vmax.xlane.f32.xlu0 %v659
  %v661 = vpop.xlane.xlu0 %660
  %v662 = vsel %vm655, %v575, -inf
  %663 = vmax.xlane.f32.xlu0 %v662
  %v664 = vpop.xlane.xlu0 %663
  %v665 = vsel %vm655, %v652, -inf
  %666 = vmax.xlane.f32.xlu0 %v665
  %v667 = vpop.xlane.xlu0 %666
  %v668 = vsub.f32 %v421, %v658
  %v669 = vsub.f32 %v498, %v661
  %v670 = vsub.f32 %v575, %v664
  %v671 = vsub.f32 %v652, %v667
  %v672 = vmul.f32 %v668, 1.442695
  %v673 = vpow.pop %v672
  %v674 = vmul.f32 %v669, 1.442695
  %v675 = vpow.pop %v674
  %v676 = vmul.f32 %v670, 1.442695
  %v677 = vpow.pop %v676
  %v678 = vmul.f32 %v671, 1.442695
  %v679 = vpow.pop %v678
  %v680 = vsel %vm655, %v673, 0.0
  %681 = vadd.xlane.f32.xlu0 %v680
  %v682 = vpop.xlane.xlu0 %681
  %v683 = vsel %vm655, %v675, 0.0
  %684 = vadd.xlane.f32.xlu0 %v683
  %v685 = vpop.xlane.xlu0 %684
  %v686 = vsel %vm655, %v677, 0.0
  %687 = vadd.xlane.f32.xlu0 %v686
  %v688 = vpop.xlane.xlu0 %687
  %v689 = vsel %vm655, %v679, 0.0
  %690 = vadd.xlane.f32.xlu0 %v689
  %v691 = vpop.xlane.xlu0 %690
  %v692 = vrcp.pop %v682
  %v693 = vmul.f32 %v673, %v692
  %v694 = vrcp.pop %v685
  %v695 = vmul.f32 %v675, %v694
  %v696 = vrcp.pop %v688
  %v697 = vmul.f32 %v677, %v696
  %v698 = vrcp.pop %v691
  %v699 = vmul.f32 %v679, %v698
  %700 = vrot.lane.b32.xlu0 %v125, 96
  %v701 = vpop.permute.xlu0 %700
  %v704 = vsel %vm655, %v693, 0
  %706 = vmatprep.subr.mxu0 0.0
  %707 = vmatpush1.msra.mxu0 %v701
  %708 = vmatprep.subr.mxu0 0.0
  %709 = vmatpush1.msra.mxu0 0.0
  %710 = vmatprep.subr.mxu0 0.0
  %711 = vmatpush1.msra.mxu0 0.0
  %712 = vmatprep.subr.mxu0 0.0
  %713 = vmatpush1.msra.mxu0 0.0
  %714 = vmatprep.subr.mxu0 0.0
  %715 = vmatpush1.msra.mxu0 0.0
  %716 = vmatprep.subr.mxu0 0.0
  %717 = vmatpush1.msra.mxu0 0.0
  %718 = vmatprep.subr.mxu0 0.0
  %719 = vmatpush1.msra.mxu0 0.0
  %720 = vmatprep.subr.mxu0 0.0
  %721 = vmatpush1.msra.mxu0 0.0
  %722 = vmatprep.subr.mxu0 0.0
  %723 = vmatpush1.msra.mxu0 0.0
  %724 = vmatprep.subr.mxu0 0.0
  %725 = vmatpush1.msra.mxu0 0.0
  %726 = vmatprep.subr.mxu0 0.0
  %727 = vmatpush1.msra.mxu0 0.0
  %728 = vmatprep.subr.mxu0 0.0
  %729 = vmatpush1.msra.mxu0 0.0
  %730 = vmatprep.subr.mxu0 0.0
  %731 = vmatpush1.msra.mxu0 0.0
  %732 = vmatprep.subr.mxu0 0.0
  %733 = vmatpush1.msra.mxu0 0.0
  %734 = vmatprep.subr.mxu0 0.0
  %735 = vmatpush1.msra.mxu0 0.0
  %736 = vmatprep.subr.mxu0 0.0
  %737 = vmatpush1.msra.mxu0 0.0
  %738 = vmatprep.subr.mxu0 0.0
  %739 = vmatpush1.msra.mxu0 0.0
  %740 = vmatprep.subr.mxu0 0.0
  %741 = vmatpush1.msra.mxu0 0.0
  %742 = vmatprep.subr.mxu0 0.0
  %743 = vmatpush1.msra.mxu0 0.0
  %744 = vmatprep.subr.mxu0 0.0
  %745 = vmatpush1.msra.mxu0 0.0
  %746 = vmatprep.subr.mxu0 0.0
  %747 = vmatpush1.msra.mxu0 0.0
  %748 = vmatprep.subr.mxu0 0.0
  %749 = vmatpush1.msra.mxu0 0.0
  %750 = vmatprep.subr.mxu0 0.0
  %751 = vmatpush1.msra.mxu0 0.0
  %752 = vmatprep.subr.mxu0 0.0
  %753 = vmatpush1.msra.mxu0 0.0
  %754 = vmatprep.subr.mxu0 0.0
  %755 = vmatpush1.msra.mxu0 0.0
  %756 = vmatprep.subr.mxu0 0.0
  %757 = vmatpush1.msra.mxu0 0.0
  %758 = vmatprep.subr.mxu0 0.0
  %759 = vmatpush1.msra.mxu0 0.0
  %760 = vmatprep.subr.mxu0 0.0
  %761 = vmatpush1.msra.mxu0 0.0
  %762 = vmatprep.subr.mxu0 0.0
  %763 = vmatpush1.msra.mxu0 0.0
  %764 = vmatprep.subr.mxu0 0.0
  %765 = vmatpush1.msra.mxu0 0.0
  %766 = vmatprep.subr.mxu0 0.0
  %767 = vmatpush1.msra.mxu0 0.0
  %768 = vmatprep.subr.mxu0 0.0
  %769 = vmatpush1.msra.mxu0 0.0
  %770 = vmatprep.mubr.f32.mxu0 0.0
  %771 = vmatmul.mubr.f32.gmra.mrb[0].mxu0 %v704
  %v772 = vpop.f32.mrb[0].mxu0
  %v773 = vadd.f32 0.0, %v772
  %v774 = vpop.f32.mrb[0].mxu0
  %775 = vdwg.mxu0
  %776 = vrot.lane.b32.xlu0 %v198, 96
  %v777 = vpop.permute.xlu0 %776
  %v780 = vsel %vm655, %v695, 0
  %782 = vmatprep.subr.mxu0 0.0
  %783 = vmatpush1.msra.mxu0 %v777
  %784 = vmatprep.subr.mxu0 0.0
  %785 = vmatpush1.msra.mxu0 0.0
  %786 = vmatprep.subr.mxu0 0.0
  %787 = vmatpush1.msra.mxu0 0.0
  %788 = vmatprep.subr.mxu0 0.0
  %789 = vmatpush1.msra.mxu0 0.0
  %790 = vmatprep.subr.mxu0 0.0
  %791 = vmatpush1.msra.mxu0 0.0
  %792 = vmatprep.subr.mxu0 0.0
  %793 = vmatpush1.msra.mxu0 0.0
  %794 = vmatprep.subr.mxu0 0.0
  %795 = vmatpush1.msra.mxu0 0.0
  %796 = vmatprep.subr.mxu0 0.0
  %797 = vmatpush1.msra.mxu0 0.0
  %798 = vmatprep.subr.mxu0 0.0
  %799 = vmatpush1.msra.mxu0 0.0
  %800 = vmatprep.subr.mxu0 0.0
  %801 = vmatpush1.msra.mxu0 0.0
  %802 = vmatprep.subr.mxu0 0.0
  %803 = vmatpush1.msra.mxu0 0.0
  %804 = vmatprep.subr.mxu0 0.0
  %805 = vmatpush1.msra.mxu0 0.0
  %806 = vmatprep.subr.mxu0 0.0
  %807 = vmatpush1.msra.mxu0 0.0
  %808 = vmatprep.subr.mxu0 0.0
  %809 = vmatpush1.msra.mxu0 0.0
  %810 = vmatprep.subr.mxu0 0.0
  %811 = vmatpush1.msra.mxu0 0.0
  %812 = vmatprep.subr.mxu0 0.0
  %813 = vmatpush1.msra.mxu0 0.0
  %814 = vmatprep.subr.mxu0 0.0
  %815 = vmatpush1.msra.mxu0 0.0
  %816 = vmatprep.subr.mxu0 0.0
  %817 = vmatpush1.msra.mxu0 0.0
  %818 = vmatprep.subr.mxu0 0.0
  %819 = vmatpush1.msra.mxu0 0.0
  %820 = vmatprep.subr.mxu0 0.0
  %821 = vmatpush1.msra.mxu0 0.0
  %822 = vmatprep.subr.mxu0 0.0
  %823 = vmatpush1.msra.mxu0 0.0
  %824 = vmatprep.subr.mxu0 0.0
  %825 = vmatpush1.msra.mxu0 0.0
  %826 = vmatprep.subr.mxu0 0.0
  %827 = vmatpush1.msra.mxu0 0.0
  %828 = vmatprep.subr.mxu0 0.0
  %829 = vmatpush1.msra.mxu0 0.0
  %830 = vmatprep.subr.mxu0 0.0
  %831 = vmatpush1.msra.mxu0 0.0
  %832 = vmatprep.subr.mxu0 0.0
  %833 = vmatpush1.msra.mxu0 0.0
  %834 = vmatprep.subr.mxu0 0.0
  %835 = vmatpush1.msra.mxu0 0.0
  %836 = vmatprep.subr.mxu0 0.0
  %837 = vmatpush1.msra.mxu0 0.0
  %838 = vmatprep.subr.mxu0 0.0
  %839 = vmatpush1.msra.mxu0 0.0
  %840 = vmatprep.subr.mxu0 0.0
  %841 = vmatpush1.msra.mxu0 0.0
  %842 = vmatprep.subr.mxu0 0.0
  %843 = vmatpush1.msra.mxu0 0.0
  %844 = vmatprep.subr.mxu0 0.0
  %845 = vmatpush1.msra.mxu0 0.0
  %846 = vmatprep.mubr.f32.mxu0 0.0
  %847 = vmatmul.mubr.f32.gmra.mrb[0].mxu0 %v780
  %v848 = vpop.f32.mrb[0].mxu0
  %v849 = vadd.f32 0.0, %v848
  %v850 = vpop.f32.mrb[0].mxu0
  %851 = vdwg.mxu0
  %852 = vrot.lane.b32.xlu0 %v271, 96
  %v853 = vpop.permute.xlu0 %852
  %v856 = vsel %vm655, %v697, 0
  %858 = vmatprep.subr.mxu0 0.0
  %859 = vmatpush1.msra.mxu0 %v853
  %860 = vmatprep.subr.mxu0 0.0
  %861 = vmatpush1.msra.mxu0 0.0
  %862 = vmatprep.subr.mxu0 0.0
  %863 = vmatpush1.msra.mxu0 0.0
  %864 = vmatprep.subr.mxu0 0.0
  %865 = vmatpush1.msra.mxu0 0.0
  %866 = vmatprep.subr.mxu0 0.0
  %867 = vmatpush1.msra.mxu0 0.0
  %868 = vmatprep.subr.mxu0 0.0
  %869 = vmatpush1.msra.mxu0 0.0
  %870 = vmatprep.subr.mxu0 0.0
  %871 = vmatpush1.msra.mxu0 0.0
  %872 = vmatprep.subr.mxu0 0.0
  %873 = vmatpush1.msra.mxu0 0.0
  %874 = vmatprep.subr.mxu0 0.0
  %875 = vmatpush1.msra.mxu0 0.0
  %876 = vmatprep.subr.mxu0 0.0
  %877 = vmatpush1.msra.mxu0 0.0
  %878 = vmatprep.subr.mxu0 0.0
  %879 = vmatpush1.msra.mxu0 0.0
  %880 = vmatprep.subr.mxu0 0.0
  %881 = vmatpush1.msra.mxu0 0.0
  %882 = vmatprep.subr.mxu0 0.0
  %883 = vmatpush1.msra.mxu0 0.0
  %884 = vmatprep.subr.mxu0 0.0
  %885 = vmatpush1.msra.mxu0 0.0
  %886 = vmatprep.subr.mxu0 0.0
  %887 = vmatpush1.msra.mxu0 0.0
  %888 = vmatprep.subr.mxu0 0.0
  %889 = vmatpush1.msra.mxu0 0.0
  %890 = vmatprep.subr.mxu0 0.0
  %891 = vmatpush1.msra.mxu0 0.0
  %892 = vmatprep.subr.mxu0 0.0
  %893 = vmatpush1.msra.mxu0 0.0
  %894 = vmatprep.subr.mxu0 0.0
  %895 = vmatpush1.msra.mxu0 0.0
  %896 = vmatprep.subr.mxu0 0.0
  %897 = vmatpush1.msra.mxu0 0.0
  %898 = vmatprep.subr.mxu0 0.0
  %899 = vmatpush1.msra.mxu0 0.0
  %900 = vmatprep.subr.mxu0 0.0
  %901 = vmatpush1.msra.mxu0 0.0
  %902 = vmatprep.subr.mxu0 0.0
  %903 = vmatpush1.msra.mxu0 0.0
  %904 = vmatprep.subr.mxu0 0.0
  %905 = vmatpush1.msra.mxu0 0.0
  %906 = vmatprep.subr.mxu0 0.0
  %907 = vmatpush1.msra.mxu0 0.0
  %908 = vmatprep.subr.mxu0 0.0
  %909 = vmatpush1.msra.mxu0 0.0
  %910 = vmatprep.subr.mxu0 0.0
  %911 = vmatpush1.msra.mxu0 0.0
  %912 = vmatprep.subr.mxu0 0.0
  %913 = vmatpush1.msra.mxu0 0.0
  %914 = vmatprep.subr.mxu0 0.0
  %915 = vmatpush1.msra.mxu0 0.0
  %916 = vmatprep.subr.mxu0 0.0
  %917 = vmatpush1.msra.mxu0 0.0
  %918 = vmatprep.subr.mxu0 0.0
  %919 = vmatpush1.msra.mxu0 0.0
  %920 = vmatprep.subr.mxu0 0.0
  %921 = vmatpush1.msra.mxu0 0.0
  %922 = vmatprep.mubr.f32.mxu0 0.0
  %923 = vmatmul.mubr.f32.gmra.mrb[0].mxu0 %v856
  %v924 = vpop.f32.mrb[0].mxu0
  %v925 = vadd.f32 0.0, %v924
  %v926 = vpop.f32.mrb[0].mxu0
  %927 = vdwg.mxu0
  %928 = vrot.lane.b32.xlu0 %v344, 96
  %v929 = vpop.permute.xlu0 %928
  %v932 = vsel %vm655, %v699, 0
  %934 = vmatprep.subr.mxu0 0.0
  %935 = vmatpush1.msra.mxu0 %v929
  %936 = vmatprep.subr.mxu0 0.0
  %937 = vmatpush1.msra.mxu0 0.0
  %938 = vmatprep.subr.mxu0 0.0
  %939 = vmatpush1.msra.mxu0 0.0
  %940 = vmatprep.subr.mxu0 0.0
  %941 = vmatpush1.msra.mxu0 0.0
  %942 = vmatprep.subr.mxu0 0.0
  %943 = vmatpush1.msra.mxu0 0.0
  %944 = vmatprep.subr.mxu0 0.0
  %945 = vmatpush1.msra.mxu0 0.0
  %946 = vmatprep.subr.mxu0 0.0
  %947 = vmatpush1.msra.mxu0 0.0
  %948 = vmatprep.subr.mxu0 0.0
  %949 = vmatpush1.msra.mxu0 0.0
  %950 = vmatprep.subr.mxu0 0.0
  %951 = vmatpush1.msra.mxu0 0.0
  %952 = vmatprep.subr.mxu0 0.0
  %953 = vmatpush1.msra.mxu0 0.0
  %954 = vmatprep.subr.mxu0 0.0
  %955 = vmatpush1.msra.mxu0 0.0
  %956 = vmatprep.subr.mxu0 0.0
  %957 = vmatpush1.msra.mxu0 0.0
  %958 = vmatprep.subr.mxu0 0.0
  %959 = vmatpush1.msra.mxu0 0.0
  %960 = vmatprep.subr.mxu0 0.0
  %961 = vmatpush1.msra.mxu0 0.0
  %962 = vmatprep.subr.mxu0 0.0
  %963 = vmatpush1.msra.mxu0 0.0
  %964 = vmatprep.subr.mxu0 0.0
  %965 = vmatpush1.msra.mxu0 0.0
  %966 = vmatprep.subr.mxu0 0.0
  %967 = vmatpush1.msra.mxu0 0.0
  %968 = vmatprep.subr.mxu0 0.0
  %969 = vmatpush1.msra.mxu0 0.0
  %970 = vmatprep.subr.mxu0 0.0
  %971 = vmatpush1.msra.mxu0 0.0
  %972 = vmatprep.subr.mxu0 0.0
  %973 = vmatpush1.msra.mxu0 0.0
  %974 = vmatprep.subr.mxu0 0.0
  %975 = vmatpush1.msra.mxu0 0.0
  %976 = vmatprep.subr.mxu0 0.0
  %977 = vmatpush1.msra.mxu0 0.0
  %978 = vmatprep.subr.mxu0 0.0
  %979 = vmatpush1.msra.mxu0 0.0
  %980 = vmatprep.subr.mxu0 0.0
  %981 = vmatpush1.msra.mxu0 0.0
  %982 = vmatprep.subr.mxu0 0.0
  %983 = vmatpush1.msra.mxu0 0.0
  %984 = vmatprep.subr.mxu0 0.0
  %985 = vmatpush1.msra.mxu0 0.0
  %986 = vmatprep.subr.mxu0 0.0
  %987 = vmatpush1.msra.mxu0 0.0
  %988 = vmatprep.subr.mxu0 0.0
  %989 = vmatpush1.msra.mxu0 0.0
  %990 = vmatprep.subr.mxu0 0.0
  %991 = vmatpush1.msra.mxu0 0.0
  %992 = vmatprep.subr.mxu0 0.0
  %993 = vmatpush1.msra.mxu0 0.0
  %994 = vmatprep.subr.mxu0 0.0
  %995 = vmatpush1.msra.mxu0 0.0
  %996 = vmatprep.subr.mxu0 0.0
  %997 = vmatpush1.msra.mxu0 0.0
  %998 = vmatprep.mubr.f32.mxu0 0.0
  %999 = vmatmul.mubr.f32.gmra.mrb[0].mxu0 %v932
  %v1000 = vpop.f32.mrb[0].mxu0
  %v1001 = vadd.f32 0.0, %v1000
  %v1002 = vpop.f32.mrb[0].mxu0
  %1003 = vdwg.mxu0
  %1004 = vst.msk [vmem:[%s3] sm:$0xff] %vm54, %v773
  %1005 = vst.msk [vmem:[%s3 + $0x8] sm:$0xff] %vm54, %v849
  %1006 = vst.msk [vmem:[%s3 + $0x10] sm:$0xff] %vm54, %v925
  %1007 = vst.msk [vmem:[%s3 + $0x18] sm:$0xff] %vm54, %v1001
  // Predicated region
  $region14: #{msa.1} parent=0 // pred_check
    _
  $region15: #{msa.1} parent=0 // pred_check_branch
    %1009 = sbr.rel (0) target = $region17
  $region16: #{msa.1} parent=0 // pred_region
    _
  $region17: #{msa.1} parent=0 // pred_fallthru
    _
  // Predicated region
  $region18: #{msa.1} parent=0 // pred_check
    _
  $region19: #{msa.1} parent=0 // pred_check_branch
    %1011 = sbr.rel (0) target = $region21
  $region20: #{msa.1} parent=0 // pred_region
    _
  $region21: #{msa.1} parent=0 // pred_fallthru
    _

</llo_original>
